<compile_context>
chip_gen: v7x
topology: tpu7x:2x2x1
jax: 0.10.0
libtpu: 0.0.40
codegen_flags: <defaults>
</compile_context>

<pallas_src>
import functools
import math

import jax
import jax.numpy as jnp
from jax.experimental import pallas as pl
from jax.experimental.pallas import tpu as pltpu


def _cdiv(a, b):
    return -(-a // b)


def _round_up(x, m):
    return _cdiv(x, m) * m


def _wbce_kernel(x_ref, t_ref, w_ref, out_ref, acc_ref, *, hard_targets):
    """grid = (parallel_chunks, inner_steps); acc_ref is a block-shaped VMEM
    accumulator reset at the start of each chunk and reduced once at its end."""
    j = pl.program_id(1)

    @pl.when(j == 0)
    def _():
        acc_ref[...] = jnp.zeros_like(acc_ref)

    p = x_ref[...].astype(jnp.float32)       # probabilities
    t = t_ref[...].astype(jnp.float32)
    w_pos = w_ref[...].astype(jnp.float32)   # (1, L) resident row, broadcasts over rows

    if hard_targets:
        # targets in {0,1}: select BEFORE the transcendental -> one log per element.
        is_pos = t > 0.5
        w = jnp.where(is_pos, w_pos, 1.0)
        log_term = jnp.maximum(jnp.log(jnp.where(is_pos, p, 1.0 - p)), -100.0)
        loss = -w * log_term
    else:
        # Soft-target fallback: two logs, matches PyTorch BCE (-100 clamp).
        w = w_pos * t + (1.0 - t)
        log_p = jnp.maximum(jnp.log(p), -100.0)
        log_1mp = jnp.maximum(jnp.log(1.0 - p), -100.0)
        loss = -w * (t * log_p + (1.0 - t) * log_1mp)

    # Pure-VPU elementwise accumulate: no per-step cross-lane reduce, no
    # serializing scalar read-modify-write.
    acc_ref[...] += loss

    @pl.when(j == pl.num_programs(1) - 1)
    def _():
        # Single cross-lane reduction per chunk; replicate the scalar into a
        # lane-dense (1, 8, 128) block so the store is unmasked (tiny output).
        out_ref[...] = jnp.broadcast_to(jnp.sum(acc_ref[...]), out_ref.shape)


def weighted_bce_loss(logits, targets, pos_weight=None, reduction="mean",
                      hard_targets=True, target_block_bytes=2 << 20):
    """Weighted BCE. `logits` are probabilities (as in F.binary_cross_entropy)."""
    B, C = logits.shape
    n_elems = B * C

    if pos_weight is None:
        pos_weight = jnp.ones((C,), dtype=jnp.float32)
    pos_weight = jnp.asarray(pos_weight, dtype=jnp.float32).reshape(C)

    if reduction == "none":
        # TODO(synk): 'none' path kept in plain JAX — pure elementwise op with
        # no reduction hot path to fuse into a kernel.
        p = logits.astype(jnp.float32)
        t = targets.astype(jnp.float32)
        w = pos_weight.reshape(1, C) * t + (1.0 - t)
        return -w * (t * jnp.maximum(jnp.log(p), -100.0)
                     + (1.0 - t) * jnp.maximum(jnp.log(1.0 - p), -100.0))
    if reduction not in ("mean", "sum"):
        raise ValueError(f"unknown reduction: {reduction}")

    # ---- Lane-dense layout: L is a multiple of 128 (vreg lanes) and of C so
    # that pos_weight tiles exactly into one (1, L) row.
    base = math.lcm(C, 128)
    L = base * max(1, _cdiv(512, base))          # at least ~512 lanes when cheap

    rows = _cdiv(n_elems, L)
    # Tile rows so each f32 block is ~target_block_bytes (1-4 MiB sweet spot),
    # multiple of 8 sublanes, never larger than the (padded) data.
    budget_rows = max(8, (target_block_bytes // (L * 4)) // 8 * 8)
    rows_per_tile = min(budget_rows, _round_up(rows, 8))
    n_tiles = _cdiv(rows, rows_per_tile)

    # Parallel chunk axis: lets v7x's 2 TensorCores split the reduction;
    # harmless on v5e/v6e (1 TC). Only used when it costs no extra padding.
    n_par = 2 if (n_tiles >= 2 and n_tiles % 2 == 0) else 1
    inner = n_tiles // n_par

    rows_padded = n_tiles * rows_per_tile
    padded_elems = rows_padded * L

    def _prep(a):
        flat = a.reshape(-1)
        if padded_elems != n_elems:
            # padded tail has p=0, t=0 -> exactly zero loss contribution.
            flat = jnp.pad(flat, (0, padded_elems - n_elems))
        return flat.reshape(rows_padded, L)

    x2 = _prep(logits)       # keep native dtype (e.g. bf16) -> fewer HBM bytes
    t2 = _prep(targets)
    w_row = jnp.tile(pos_weight, L // C).reshape(1, L)

    # VMEM budget: 2 streaming inputs x 2 pipeline buffers + f32 accumulator.
    # Sized so it fits v7x's 64 MiB VMEM with headroom; explicit limit set.
    blk = rows_per_tile * L
    stream_bytes = 2 * blk * x2.dtype.itemsize + 2 * blk * t2.dtype.itemsize
    acc_bytes = blk * 4
    vmem_needed = stream_bytes + acc_bytes + 2 * L * 4 + 2 * (8 * 128 * 4)
    vmem_limit = int(min(56 << 20, max(16 << 20, 2 * vmem_needed)))

    cost = pl.CostEstimate(
        flops=7 * padded_elems,
        transcendentals=(1 if hard_targets else 2) * padded_elems,
        bytes_accessed=padded_elems * (x2.dtype.itemsize + t2.dtype.itemsize)
        + n_par * 8 * 128 * 4,
    )

    kernel = functools.partial(_wbce_kernel, hard_targets=hard_targets)
    partials = pl.pallas_call(
        kernel,
        out_shape=jax.ShapeDtypeStruct((n_par, 8, 128), jnp.float32),
        grid_spec=pltpu.PrefetchScalarGridSpec(
            num_scalar_prefetch=0,
            grid=(n_par, inner),
            in_specs=[
                pl.BlockSpec((rows_per_tile, L), lambda p, j: (p * inner + j, 0)),
                pl.BlockSpec((rows_per_tile, L), lambda p, j: (p * inner + j, 0)),
                pl.BlockSpec((1, L), lambda p, j: (0, 0)),  # resident pos_weight row
            ],
            out_specs=pl.BlockSpec((1, 8, 128), lambda p, j: (p, 0, 0)),
            scratch_shapes=[pltpu.VMEM((rows_per_tile, L), jnp.float32)],
        ),
        compiler_params=pltpu.CompilerParams(
            dimension_semantics=("parallel", "arbitrary"),
            vmem_limit_bytes=vmem_limit,
        ),
        cost_estimate=cost,
    )(x2, t2, w_row)
    # TODO(synk): pipeline_mode=pl.Buffered(3) on the two streaming inputs is a
    # further (few %) option if xprof still shows exposed DMA.

    total = jnp.sum(partials[:, 0, 0])
    if reduction == "sum":
        return total
    return total / jnp.float32(n_elems)


if __name__ == "__main__":
    key = jax.random.PRNGKey(0)
    k1, k2, k3 = jax.random.split(key, 3)

    B, C = 16, 32
    # "logits" are probabilities in (0, 1), matching F.binary_cross_entropy.
    probs = jax.nn.sigmoid(jax.random.normal(k1, (B, C), dtype=jnp.float32))
    targets = (jax.random.uniform(k2, (B, C)) > 0.5).astype(jnp.float32)
    pos_weight = 0.5 + jax.random.uniform(k3, (C,), dtype=jnp.float32) * 2.0

    # Pure-JAX reference (PyTorch BCE with -100 log clamp).
    w = pos_weight.reshape(1, C) * targets + (1.0 - targets)
    per_elem = -w * (targets * jnp.maximum(jnp.log(probs), -100.0)
                     + (1.0 - targets) * jnp.maximum(jnp.log(1.0 - probs), -100.0))

    out_mean = jax.block_until_ready(
        weighted_bce_loss(probs, targets, pos_weight=pos_weight, reduction="mean"))
    assert jnp.allclose(out_mean, jnp.mean(per_elem), rtol=1e-5, atol=1e-5), (
        out_mean, jnp.mean(per_elem))

    out_sum = jax.block_until_ready(
        weighted_bce_loss(probs, targets, pos_weight=None, reduction="sum"))
    ref_sum = jnp.sum(-(targets * jnp.maximum(jnp.log(probs), -100.0)
                        + (1.0 - targets) * jnp.maximum(jnp.log(1.0 - probs), -100.0)))
    assert jnp.allclose(out_sum, ref_sum, rtol=1e-5, atol=1e-4), (out_sum, ref_sum)

    print("KERNEL_OK")
</pallas_src>

<mosaic_0001>
module attributes {stable_mosaic.version = 11 : i64} {
  func.func @_wbce_kernel(%arg0: i32, %arg1: i32, %arg2: memref<8x512xf32, #tpu.memory_space<vmem>>, %arg3: memref<8x512xf32, #tpu.memory_space<vmem>>, %arg4: memref<1x512xf32, #tpu.memory_space<vmem>>, %arg5: memref<1x8x128xf32, #tpu.memory_space<vmem>>, %arg6: memref<8x512xf32, #tpu.memory_space<vmem>>) attributes {dimension_semantics = [#tpu.dimension_semantics<parallel>, #tpu.dimension_semantics<arbitrary>], iteration_bounds = array<i64: 1, 1>, scalar_prefetch = 0 : i64, scratch_operands = 1 : i64, tpu.core_type = #tpu.core_type<tc>, window_params = [{transform_indices = @transform_0, window_bounds = array<i64: 8, 512>}, {transform_indices = @transform_1, window_bounds = array<i64: 8, 512>}, {pipeline_mode = #tpu.pipeline_mode<synchronous>, transform_indices = @transform_2, window_bounds = array<i64: 1, 512>}, {transform_indices = @transform_3, window_bounds = array<i64: 1, 8, 128>}]} {
    %c0_i32 = arith.constant 0 : i32
    %0 = arith.cmpi eq, %arg1, %c0_i32 : i32
    %1 = arith.extui %0 : i1 to i32
    %c0_i32_0 = arith.constant 0 : i32
    %2 = arith.cmpi ne, %1, %c0_i32_0 : i32
    scf.if %2 {
      %cst_16 = arith.constant 0.000000e+00 : f32
      %27 = vector.broadcast %cst_16 : f32 to vector<8x512xf32>
      %c0_17 = arith.constant 0 : index
      %c0_18 = arith.constant 0 : index
      %28 = vector.load %arg6[%c0_17, %c0_18] : memref<8x512xf32, #tpu.memory_space<vmem>>, vector<8x512xf32>
      tpu.vector_store %arg6[%c0_17, %c0_18], %27 {strides = array<i32>} : memref<8x512xf32, #tpu.memory_space<vmem>>, vector<8x512xf32>,
    } else {
    }
    %c0 = arith.constant 0 : index
    %c0_1 = arith.constant 0 : index
    %3 = vector.load %arg2[%c0, %c0_1] : memref<8x512xf32, #tpu.memory_space<vmem>>, vector<8x512xf32>
    %c0_2 = arith.constant 0 : index
    %c0_3 = arith.constant 0 : index
    %4 = vector.load %arg3[%c0_2, %c0_3] : memref<8x512xf32, #tpu.memory_space<vmem>>, vector<8x512xf32>
    %c0_4 = arith.constant 0 : index
    %c0_5 = arith.constant 0 : index
    %5 = vector.load %arg4[%c0_4, %c0_5] : memref<1x512xf32, #tpu.memory_space<vmem>>, vector<1x512xf32>
    %cst = arith.constant 5.000000e-01 : f32
    %6 = vector.broadcast %cst : f32 to vector<8x512xf32>
    %7 = arith.cmpf ogt, %4, %6 : vector<8x512xf32>
    %cst_6 = arith.constant 1.000000e+00 : f32
    %8 = vector.shape_cast %5 : vector<1x512xf32> to vector<1x512xf32>
    %9 = vector.broadcast %8 : vector<1x512xf32> to vector<8x512xf32>
    %10 = vector.broadcast %cst_6 : f32 to vector<8x512xf32>
    %11 = arith.select %7, %9, %10 : vector<8x512xi1>, vector<8x512xf32>
    %cst_7 = arith.constant 1.000000e+00 : f32
    %12 = vector.broadcast %cst_7 : f32 to vector<8x512xf32>
    %13 = arith.subf %12, %3 : vector<8x512xf32>
    %14 = arith.select %7, %3, %13 : vector<8x512xi1>, vector<8x512xf32>
    %15 = math.log %14 : vector<8x512xf32>
    %cst_8 = arith.constant -1.000000e+02 : f32
    %16 = vector.broadcast %cst_8 : f32 to vector<8x512xf32>
    %17 = arith.maximumf %15, %16 : vector<8x512xf32>
    %cst_9 = arith.constant 0.000000e+00 : f32
    %18 = vector.broadcast %cst_9 : f32 to vector<8x512xf32>
    %19 = arith.subf %18, %11 : vector<8x512xf32>
    %20 = arith.mulf %19, %17 : vector<8x512xf32>
    %c0_10 = arith.constant 0 : index
    %c0_11 = arith.constant 0 : index
    %21 = vector.load %arg6[%c0_10, %c0_11] : memref<8x512xf32, #tpu.memory_space<vmem>>, vector<8x512xf32>
    %22 = arith.addf %21, %20 : vector<8x512xf32>
    %c0_12 = arith.constant 0 : index
    %c0_13 = arith.constant 0 : index
    %23 = vector.load %arg6[%c0_12, %c0_13] : memref<8x512xf32, #tpu.memory_space<vmem>>, vector<8x512xf32>
    tpu.vector_store %arg6[%c0_12, %c0_13], %22 {strides = array<i32>} : memref<8x512xf32, #tpu.memory_space<vmem>>, vector<8x512xf32>,
    %c0_i32_14 = arith.constant 0 : i32
    %24 = arith.cmpi eq, %arg1, %c0_i32_14 : i32
    %25 = arith.extui %24 : i1 to i32
    %c0_i32_15 = arith.constant 0 : i32
    %26 = arith.cmpi ne, %25, %c0_i32_15 : i32
    scf.if %26 {
      %c0_16 = arith.constant 0 : index
      %c0_17 = arith.constant 0 : index
      %27 = vector.load %arg6[%c0_16, %c0_17] : memref<8x512xf32, #tpu.memory_space<vmem>>, vector<8x512xf32>
      %28 = vector.shape_cast %27 : vector<8x512xf32> to vector<1x8x512xf32>
      %cst_18 = arith.constant dense<0.000000e+00> : vector<1xf32>
      %29 = vector.multi_reduction <add>, %28, %cst_18 [1, 2] : vector<1x8x512xf32> to vector<1xf32>
      %30 = vector.shape_cast %29 : vector<1xf32> to vector<1x1x1xf32>
      %31 = vector.extract %30[0, 0, 0] : f32 from vector<1x1x1xf32>
      %32 = vector.broadcast %31 : f32 to vector<1x8x128xf32>
      %c0_19 = arith.constant 0 : index
      %c0_20 = arith.constant 0 : index
      %c0_21 = arith.constant 0 : index
      %33 = vector.load %arg5[%c0_19, %c0_20, %c0_21] : memref<1x8x128xf32, #tpu.memory_space<vmem>>, vector<1x8x128xf32>
      tpu.vector_store %arg5[%c0_19, %c0_20, %c0_21], %32 {strides = array<i32>} : memref<1x8x128xf32, #tpu.memory_space<vmem>>, vector<1x8x128xf32>,
    } else {
    }
    return
  }
  func.func @transform_0(%arg0: i32, %arg1: i32) -> (i32, i32) {
    %c1_i32 = arith.constant 1 : i32
    %0 = arith.muli %arg0, %c1_i32 : i32
    %1 = arith.addi %0, %arg1 : i32
    %c0_i32 = arith.constant 0 : i32
    %c0_i32_0 = arith.constant 0 : i32
    return %1, %c0_i32 : i32, i32
  }
  func.func @transform_1(%arg0: i32, %arg1: i32) -> (i32, i32) {
    %c1_i32 = arith.constant 1 : i32
    %0 = arith.muli %arg0, %c1_i32 : i32
    %1 = arith.addi %0, %arg1 : i32
    %c0_i32 = arith.constant 0 : i32
    %c0_i32_0 = arith.constant 0 : i32
    return %1, %c0_i32 : i32, i32
  }
  func.func @transform_2(%arg0: i32, %arg1: i32) -> (i32, i32) {
    %c0_i32 = arith.constant 0 : i32
    %c0_i32_0 = arith.constant 0 : i32
    %c0_i32_1 = arith.constant 0 : i32
    return %c0_i32, %c0_i32_0 : i32, i32
  }
  func.func @transform_3(%arg0: i32, %arg1: i32) -> (i32, i32, i32) {
    %c0_i32 = arith.constant 0 : i32
    %c0_i32_0 = arith.constant 0 : i32
    %c0_i32_1 = arith.constant 0 : i32
    return %arg0, %c0_i32, %c0_i32_0 : i32, i32, i32
  }
}

</mosaic_0001>

<llo_original>
// kernel: tpu_custom_call.1
$region0: #{tpu_custom_call.1}
  #allocation0 [shape = 'u32[]', space=smem, size = 0x4, offset = 0x4, fixed_abs, tag = 'smem constant byte address 0x4 - core index']
  #allocation1 [shape = 'u32[144,128]{1,0:T(1,128)}', space=vmem, size = 0x12000, scoped, tag = 'internal scratch']
  #allocation2 [shape = 'f32[8,512]{1,0:T(8,128)}', space=vmem, size = 0x4000, scoped, tag = 'scratch operand']
  %s0 = inlined_call_operand.hbm [shape: f32[8,512], index: 0, kind: input, shape index: {}]
  %s1 = inlined_call_operand.hbm [shape: f32[8,512], index: 1, kind: input, shape index: {}]
  %s2 = inlined_call_operand.vmem [shape: f32[1,512], index: 2, kind: input, shape index: {}]
  %s3 = inlined_call_operand.hbm [shape: f32[1,8,128], index: 3, kind: output, shape index: {}]
  %s4 = sld [smem:[#allocation0]]
  $region38: #{tpu_custom_call.1} parent=0
    _
  %s6 = ssub.s32 1, %s4
  %s7 = scalar_select 0, %s6, %s4
  $region1: #{tpu_custom_call.1} parent=0
    #allocation3 [shape = 'u8[16384]{0}', space=vmem, size = 0x4000, scoped, tag = 'input window, operand 0, single buffered']
    #allocation4 [shape = 's32[1]{0}', space=sflag, size = 0x4, scoped, tag = 'scoped memory for tpu_custom_call.1']
    #allocation5 [shape = 's32[1]{0}', space=sflag, size = 0x4, scoped, tag = 'scoped memory for tpu_custom_call.1']
    #allocation6 [shape = 'u8[16384]{0}', space=vmem, size = 0x4000, scoped, tag = 'input window, operand 1, single buffered']
    #allocation7 [shape = 's32[1]{0}', space=sflag, size = 0x4, scoped, tag = 'scoped memory for tpu_custom_call.1']
    #allocation8 [shape = 'u8[4096]{0}', space=vmem, size = 0x1000, scoped, tag = 'output window, operand 0, single buffered']
    %8 = vsyncpa [#allocation4], 0
    %9 = vsyncpa [#allocation7], 0
    %10 = vsyncpa [#allocation5], 0
    // Predicated region
    $region2: #{tpu_custom_call.1} parent=1 // pred_check
      _
    $region3: #{tpu_custom_call.1} parent=1 // pred_check_branch
      %12 = sbr.rel (0) target = $region5
    $region4: #{tpu_custom_call.1} parent=1 // pred_region
      %s13 = sadd.s32 0, 0
      %s15 = ssub.s32 512, 512
      %16 = vsyncadd [#allocation4], %s15
      %s17 = smul.addr %s13, 4
      %s18 = smul.addr %s17, 128
      %s19 = scalar_lea.hbm %s0, %s18
      %s21 = sshll.u32 [#allocation3], 4
      %s22 = int_to_ptr.vmem [resolvable:$true] %s21
      %24 = dma.hbm_to_vmem [thread:$0]  %s19, 512, %s22, [#allocation4]
    $region5: #{tpu_custom_call.1} parent=1 // pred_fallthru
      _
    // Predicated region
    $region6: #{tpu_custom_call.1} parent=1 // pred_check
      _
    $region7: #{tpu_custom_call.1} parent=1 // pred_check_branch
      %26 = sbr.rel (0) target = $region9
    $region8: #{tpu_custom_call.1} parent=1 // pred_region
      %s27 = sadd.s32 0, 0
      %s29 = ssub.s32 512, 512
      %30 = vsyncadd [#allocation7], %s29
      %s31 = smul.addr %s27, 4
      %s32 = smul.addr %s31, 128
      %s33 = scalar_lea.hbm %s1, %s32
      %s35 = sshll.u32 [#allocation6], 4
      %s36 = int_to_ptr.vmem [resolvable:$true] %s35
      %38 = dma.hbm_to_vmem [thread:$0]  %s33, 512, %s36, [#allocation7]
    $region9: #{tpu_custom_call.1} parent=1 // pred_fallthru
      _
    // Predicated region
    $region10: #{tpu_custom_call.1} parent=1 // pred_check
      _
    $region11: #{tpu_custom_call.1} parent=1 // pred_check_branch
      %40 = sbr.rel (0) target = $region13
    $region12: #{tpu_custom_call.1} parent=1 // pred_region
      _
    $region13: #{tpu_custom_call.1} parent=1 // pred_fallthru
      _
    // Predicated region
    $region14: #{tpu_custom_call.1} parent=1 // pred_check
      _
    $region15: #{tpu_custom_call.1} parent=1 // pred_check_branch
      %42 = sbr.rel (0) target = $region17
    $region16: #{tpu_custom_call.1} parent=1 // pred_region
      %43 = dma.done [#allocation4], 512
    $region17: #{tpu_custom_call.1} parent=1 // pred_fallthru
      _
    // Predicated region
    $region18: #{tpu_custom_call.1} parent=1 // pred_check
      _
    $region19: #{tpu_custom_call.1} parent=1 // pred_check_branch
      %45 = sbr.rel (0) target = $region21
    $region20: #{tpu_custom_call.1} parent=1 // pred_region
      %46 = dma.done [#allocation7], 512
    $region21: #{tpu_custom_call.1} parent=1 // pred_fallthru
      _
    %s47 = sadd.s32 0, 0
    %s48 = sadd.s32 0, 0
    %p49 = scmp.eq.s32.totalorder 0, 0
    // Predicated region
    $region22: #{tpu_custom_call.1} parent=1 // pred_check
      %p50 = pneg %p49
    $region23: #{tpu_custom_call.1} parent=1 // pred_check_branch
      %52 = sbr.rel (%p50) target = $region25
    $region24: #{tpu_custom_call.1} parent=1 // pred_region
      %53 = vst [vmem:[#allocation2] sm:$0xff] 0.0
      %54 = vst [vmem:[#allocation2 + $0x8] sm:$0xff] 0.0
      %55 = vst [vmem:[#allocation2 + $0x10] sm:$0xff] 0.0
      %56 = vst [vmem:[#allocation2 + $0x18] sm:$0xff] 0.0
    $region25: #{tpu_custom_call.1} parent=1 // pred_fallthru
      _
    %v57 = vld [vmem:[#allocation3] sm:$0xff]
    %v58 = vld [vmem:[#allocation3 + $0x8] sm:$0xff]
    %v59 = vld [vmem:[#allocation3 + $0x10] sm:$0xff]
    %v60 = vld [vmem:[#allocation3 + $0x18] sm:$0xff]
    %v61 = vld [vmem:[#allocation6] sm:$0xff]
    %v62 = vld [vmem:[#allocation6 + $0x8] sm:$0xff]
    %v63 = vld [vmem:[#allocation6 + $0x10] sm:$0xff]
    %v64 = vld [vmem:[#allocation6 + $0x18] sm:$0xff]
    %v65 = vld [vmem:[%s2] sm:$0xf]
    %vm66 = vcmp.gt.f32.partialorder %v61, 0.5
    %vm67 = vcmp.gt.f32.partialorder %v62, 0.5
    %vm68 = vcmp.gt.f32.partialorder %v63, 0.5
    %vm69 = vcmp.gt.f32.partialorder %v64, 0.5
    %v71 = vlaneseq
    %v72 = vshrl.u32 %v71, 7
    %v73 = vsub.s32 0, %v72
    %v74 = vrot.slane %v65, %v73
    %v75 = vlaneseq
    %v76 = vshrl.u32 %v75, 7
    %v77 = vsub.s32 1, %v76
    %v78 = vrot.slane %v65, %v77
    %v79 = vlaneseq
    %v80 = vshrl.u32 %v79, 7
    %v81 = vsub.s32 2, %v80
    %v82 = vrot.slane %v65, %v81
    %v83 = vlaneseq
    %v84 = vshrl.u32 %v83, 7
    %v85 = vsub.s32 3, %v84
    %v86 = vrot.slane %v65, %v85
    %v91 = vsel %vm66, %v74, 1.0
    %v92 = vsel %vm67, %v78, 1.0
    %v93 = vsel %vm68, %v82, 1.0
    %v94 = vsel %vm69, %v86, 1.0
    %v95 = vsub.f32 1.0, %v57
    %v96 = vsub.f32 1.0, %v58
    %v97 = vsub.f32 1.0, %v59
    %v98 = vsub.f32 1.0, %v60
    %v99 = vsel %vm66, %v57, %v95
    %v100 = vsel %vm67, %v58, %v96
    %v101 = vsel %vm68, %v59, %v97
    %v102 = vsel %vm69, %v60, %v98
    %v103 = vlog2.pop %v99
    %v104 = vmul.f32 %v103, 0.6931472
    %v105 = vlog2.pop %v100
    %v106 = vmul.f32 %v105, 0.6931472
    %v107 = vlog2.pop %v101
    %v108 = vmul.f32 %v107, 0.6931472
    %v109 = vlog2.pop %v102
    %v110 = vmul.f32 %v109, 0.6931472
    %v111 = vmax.f32 %v104, -100.0
    %v112 = vmax.f32 %v106, -100.0
    %v113 = vmax.f32 %v108, -100.0
    %v114 = vmax.f32 %v110, -100.0
    %v115 = vsub.f32 0.0, %v91
    %v116 = vsub.f32 0.0, %v92
    %v117 = vsub.f32 0.0, %v93
    %v118 = vsub.f32 0.0, %v94
    %v119 = vmul.f32 %v115, %v111
    %v120 = vmul.f32 %v116, %v112
    %v121 = vmul.f32 %v117, %v113
    %v122 = vmul.f32 %v118, %v114
    %v123 = vld [vmem:[#allocation2] sm:$0xff]
    %v124 = vld [vmem:[#allocation2 + $0x8] sm:$0xff]
    %v125 = vld [vmem:[#allocation2 + $0x10] sm:$0xff]
    %v126 = vld [vmem:[#allocation2 + $0x18] sm:$0xff]
    %v127 = vadd.f32 %v123, %v119
    %v128 = vadd.f32 %v124, %v120
    %v129 = vadd.f32 %v125, %v121
    %v130 = vadd.f32 %v126, %v122
    %131 = vst [vmem:[#allocation2] sm:$0xff] %v127
    %132 = vst [vmem:[#allocation2 + $0x8] sm:$0xff] %v128
    %133 = vst [vmem:[#allocation2 + $0x10] sm:$0xff] %v129
    %134 = vst [vmem:[#allocation2 + $0x18] sm:$0xff] %v130
    // Predicated region
    $region26: #{tpu_custom_call.1} parent=1 // pred_check
      %p135 = pneg %p49
    $region27: #{tpu_custom_call.1} parent=1 // pred_check_branch
      %137 = sbr.rel (%p135) target = $region29
    $region28: #{tpu_custom_call.1} parent=1 // pred_region
      %v138 = vld [vmem:[#allocation2] sm:$0xff]
      %v139 = vld [vmem:[#allocation2 + $0x8] sm:$0xff]
      %v140 = vld [vmem:[#allocation2 + $0x10] sm:$0xff]
      %v141 = vld [vmem:[#allocation2 + $0x18] sm:$0xff]
      %v142 = vadd.f32 %v138, %v139
      %v143 = vadd.f32 %v142, %v140
      %v144 = vadd.f32 %v143, %v141
      %145 = vadd.xlane.f32.xlu0 %v144
      %v146 = vpop.xlane.xlu0 %145
      %v147 = vrot.slane %v146, 4
      %v148 = vadd.f32 %v146, %v147
      %v149 = vrot.slane %v148, 2
      %v150 = vadd.f32 %v148, %v149
      %v151 = vrot.slane %v150, 1
      %v152 = vadd.f32 %v150, %v151
      %s153 = vtos %v152
      %v154 = vstv %s153
      %155 = vst [vmem:[#allocation8] sm:$0xff] %v154
    $region29: #{tpu_custom_call.1} parent=1 // pred_fallthru
      _
    // Predicated region
    $region30: #{tpu_custom_call.1} parent=1 // pred_check
      _
    $region31: #{tpu_custom_call.1} parent=1 // pred_check_branch
      %157 = sbr.rel (0) target = $region33
    $region32: #{tpu_custom_call.1} parent=1 // pred_region
      %s159 = ssub.s32 128, 128
      %160 = vsyncadd [#allocation5], %s159
      %s162 = sshll.u32 [#allocation8], 4
      %s163 = int_to_ptr.vmem [resolvable:$true] %s162
      %165 = dma.vmem_to_hbm [thread:$0]  %s163, 128, %s3, [#allocation5]
    $region33: #{tpu_custom_call.1} parent=1 // pred_fallthru
      _
    // Predicated region
    $region34: #{tpu_custom_call.1} parent=1 // pred_check
      _
    $region35: #{tpu_custom_call.1} parent=1 // pred_check_branch
      %167 = sbr.rel (0) target = $region37
    $region36: #{tpu_custom_call.1} parent=1 // pred_region
      %168 = dma.done [#allocation5], 128
    $region37: #{tpu_custom_call.1} parent=1 // pred_fallthru
      _
    %169 = vsyncpa [#allocation4], 1
    %170 = vsyncpa [#allocation7], 1
    %171 = vsyncpa [#allocation5], 1

</llo_original>
